<compile_context>
chip_gen: v7x
topology: tpu7x:2x2x1
jax: 0.10.0
libtpu: 0.0.40
codegen_flags: <defaults>
</compile_context>

<pallas_src>
import functools

import jax
import jax.numpy as jnp
from jax.experimental import pallas as pl
from jax.experimental.pallas import tpu as pltpu


NEG_SLOPE = 0.01
EPS = 1e-3


def conv_block_kernel(inv_count, x_ref, w_ref, b_ref, g_ref, beta_ref, o_ref,
                      s1_ref, s2_ref):
    # x_ref:   (1, Cin, T)      (NCHW sample slab, HW-tiled, lane dim = T)
    # w_ref:   (Cout, Cin)      (PyTorch Conv2d weight squeezed)
    # b_ref/g_ref/beta_ref: (Cout, 1)
    # o_ref:   (1, Cout, T)     (already NCHW layout)
    # s1_ref/s2_ref: (Cout, 1)  VMEM scratch: running per-channel sum / sum of squares
    p = pl.program_id(1)   # 0 = statistics pass, 1 = normalize/write pass
    k = pl.program_id(2)   # HW tile index

    x = x_ref[0]                                                     # (Cin, T)
    # --- 1x1 conv == channel matmul on the MXU, lane-dense in T ---
    y = jnp.dot(w_ref[...], x, preferred_element_type=jnp.float32)   # (Cout, T)
    y = y + b_ref[...]                                               # (Cout, 1) bcast

    @pl.when((p == 0) & (k == 0))
    def _():
        s1_ref[...] = jnp.zeros_like(s1_ref)
        s2_ref[...] = jnp.zeros_like(s2_ref)

    @pl.when(p == 0)
    def _():
        # Single traversal accumulates both moments (per-channel partials).
        s1_ref[...] += jnp.sum(y, axis=1, keepdims=True)
        s2_ref[...] += jnp.sum(y * y, axis=1, keepdims=True)

    @pl.when(p == 1)
    def _():
        # GroupNorm(groups=1): stats over the whole (Cout, HW) sample, biased var.
        s1 = jnp.sum(s1_ref[...])
        s2 = jnp.sum(s2_ref[...])
        mean = s1 * inv_count
        var = s2 * inv_count - mean * mean
        inv_std = jax.lax.rsqrt(var + EPS)
        scale = g_ref[...] * inv_std                 # (Cout, 1)
        shift = beta_ref[...] - mean * scale         # (Cout, 1)
        z = y * scale + shift                        # one FMA per element
        z = jnp.where(z >= 0, z, NEG_SLOPE * z)      # LeakyReLU
        o_ref[0] = z.astype(o_ref.dtype)


def _pick_hw_tile(hw, cin, cout, vmem_budget_bytes=8 * 2**20, max_tile=2048):
    """Largest multiple of 128 that divides HW, capped by a VMEM budget."""
    if hw % 128 != 0:
        return hw  # full extent (allowed: block dim equals the array dim)
    cap = (vmem_budget_bytes // (4 * 2 * max(1, cin + cout))) // 128 * 128
    cap = max(128, min(max_tile, cap))
    best = 128
    t = 128
    while t <= min(hw, cap):
        if hw % t == 0:
            best = t
        t += 128
    return best


def conv_block(x_nchw, w, b, gamma, beta, *, hw_tile=None):
    """x_nchw: (N, Cin, H, W) f32. w: (Cout, Cin). b/gamma/beta: (Cout,)."""
    N, Cin, H, W = x_nchw.shape
    Cout = w.shape[0]
    HW = H * W

    # Pure reshapes only -- no transposes, no extra HBM passes.
    x = x_nchw.reshape(N, Cin, HW)
    b2 = b.reshape(Cout, 1)
    g2 = gamma.reshape(Cout, 1)
    be2 = beta.reshape(Cout, 1)

    T = hw_tile if hw_tile is not None else _pick_hw_tile(HW, Cin, Cout)
    assert HW % T == 0, "hw_tile must divide H*W"
    K = HW // T
    inv_count = 1.0 / float(Cout * HW)

    # Explicit VMEM sizing (double-buffered x/out tiles + resident weights/params).
    block_bytes = 4 * (2 * Cin * T + 2 * Cout * T + 2 * Cin * Cout + 8 * Cout)
    vmem_limit = int(min(48 * 2**20, max(16 * 2**20, 4 * block_bytes)))

    cost = pl.CostEstimate(
        flops=int(4 * N * HW * Cin * Cout),            # matmul done in both phases
        transcendentals=int(N * K),                    # rsqrt per normalize tile
        bytes_accessed=int(4 * (2 * N * Cin * HW + N * Cout * HW
                                + Cin * Cout + 3 * Cout)),
    )

    kernel = functools.partial(conv_block_kernel, inv_count)

    out = pl.pallas_call(
        kernel,
        out_shape=jax.ShapeDtypeStruct((N, Cout, HW), x.dtype),
        grid_spec=pltpu.PrefetchScalarGridSpec(
            num_scalar_prefetch=0,
            grid=(N, 2, K),
            in_specs=[
                pl.BlockSpec((1, Cin, T), lambda n, p, k: (n, 0, k)),
                pl.BlockSpec((Cout, Cin), lambda n, p, k: (0, 0)),
                pl.BlockSpec((Cout, 1), lambda n, p, k: (0, 0)),
                pl.BlockSpec((Cout, 1), lambda n, p, k: (0, 0)),
                pl.BlockSpec((Cout, 1), lambda n, p, k: (0, 0)),
            ],
            # During the stats phase (p=0) the output block index is pinned to tile 0,
            # so the output stays resident and is only written back after the final
            # normalized values are stored in phase 1.
            out_specs=pl.BlockSpec((1, Cout, T), lambda n, p, k: (n, 0, p * k)),
            scratch_shapes=[
                pltpu.VMEM((Cout, 1), jnp.float32),   # running sum(y) per channel
                pltpu.VMEM((Cout, 1), jnp.float32),   # running sum(y*y) per channel
            ],
        ),
        compiler_params=pltpu.CompilerParams(
            dimension_semantics=("parallel", "arbitrary", "arbitrary"),
            vmem_limit_bytes=vmem_limit,
        ),
        cost_estimate=cost,
    )(x, w, b2, g2, be2)

    return out.reshape(N, Cout, H, W)


def conv_block_ref(x_nchw, w, b, gamma, beta):
    """Pure-JAX reference (matches PyTorch semantics)."""
    N, Cin, H, W = x_nchw.shape
    Cout = w.shape[0]
    x = x_nchw.reshape(N, Cin, H * W)
    y = jnp.einsum("oc,ncs->nos", w, x) + b[None, :, None]
    mean = jnp.mean(y, axis=(1, 2), keepdims=True)
    var = jnp.mean((y - mean) ** 2, axis=(1, 2), keepdims=True)
    y = (y - mean) / jnp.sqrt(var + EPS)
    y = y * gamma[None, :, None] + beta[None, :, None]
    y = jnp.where(y >= 0, y, NEG_SLOPE * y)
    return y.reshape(N, Cout, H, W)


if __name__ == "__main__":
    key = jax.random.PRNGKey(0)
    k_x, k_w, k_b, k_g, k_be = jax.random.split(key, 5)

    N, Cin, Cout, H, W = 2, 4, 8, 16, 16

    x = jax.random.normal(k_x, (N, Cin, H, W), dtype=jnp.float32)
    # Conv2d weight (Cout, Cin, 1, 1) squeezed to (Cout, Cin); deterministic params.
    w = jax.random.normal(k_w, (Cout, Cin), dtype=jnp.float32) * 0.1
    b = jax.random.normal(k_b, (Cout,), dtype=jnp.float32) * 0.1
    gamma = 1.0 + 0.1 * jax.random.normal(k_g, (Cout,), dtype=jnp.float32)
    beta = 0.1 * jax.random.normal(k_be, (Cout,), dtype=jnp.float32)

    ref = conv_block_ref(x, w, b, gamma, beta)

    # Default tiling (single HW tile at this small size).
    out = jax.block_until_ready(conv_block(x, w, b, gamma, beta))
    assert out.shape == (N, Cout, H, W)
    assert jnp.allclose(out, ref, atol=2e-4, rtol=2e-4)

    # Force HW tiling (K=2) to exercise the cross-tile two-pass GroupNorm path.
    out_tiled = jax.block_until_ready(conv_block(x, w, b, gamma, beta, hw_tile=128))
    assert jnp.allclose(out_tiled, ref, atol=2e-4, rtol=2e-4)

    print("KERNEL_OK")
</pallas_src>

<mosaic_0001>
module attributes {stable_mosaic.version = 11 : i64} {
  func.func @conv_block_kernel(%arg0: i32, %arg1: i32, %arg2: i32, %arg3: memref<1x4x256xf32, #tpu.memory_space<vmem>>, %arg4: memref<8x4xf32, #tpu.memory_space<vmem>>, %arg5: memref<8x1xf32, #tpu.memory_space<vmem>>, %arg6: memref<8x1xf32, #tpu.memory_space<vmem>>, %arg7: memref<8x1xf32, #tpu.memory_space<vmem>>, %arg8: memref<1x8x256xf32, #tpu.memory_space<vmem>>, %arg9: memref<8x1xf32, #tpu.memory_space<vmem>>, %arg10: memref<8x1xf32, #tpu.memory_space<vmem>>) attributes {dimension_semantics = [#tpu.dimension_semantics<parallel>, #tpu.dimension_semantics<arbitrary>, #tpu.dimension_semantics<arbitrary>], iteration_bounds = array<i64: 2, 2, 1>, scalar_prefetch = 0 : i64, scratch_operands = 2 : i64, tpu.core_type = #tpu.core_type<tc>, window_params = [{transform_indices = @transform_0, window_bounds = array<i64: 1, 4, 256>}, {pipeline_mode = #tpu.pipeline_mode<synchronous>, transform_indices = @transform_1, window_bounds = array<i64: 8, 4>}, {pipeline_mode = #tpu.pipeline_mode<synchronous>, transform_indices = @transform_2, window_bounds = array<i64: 8, 1>}, {pipeline_mode = #tpu.pipeline_mode<synchronous>, transform_indices = @transform_3, window_bounds = array<i64: 8, 1>}, {pipeline_mode = #tpu.pipeline_mode<synchronous>, transform_indices = @transform_4, window_bounds = array<i64: 8, 1>}, {transform_indices = @transform_5, window_bounds = array<i64: 1, 8, 256>}]} {
    %c0 = arith.constant 0 : index
    %c0_0 = arith.constant 0 : index
    %c0_1 = arith.constant 0 : index
    %0 = vector.load %arg3[%c0, %c0_0, %c0_1] : memref<1x4x256xf32, #tpu.memory_space<vmem>>, vector<1x4x256xf32>
    %1 = vector.shape_cast %0 : vector<1x4x256xf32> to vector<4x256xf32>
    %c0_2 = arith.constant 0 : index
    %c0_3 = arith.constant 0 : index
    %2 = vector.load %arg4[%c0_2, %c0_3] : memref<8x4xf32, #tpu.memory_space<vmem>>, vector<8x4xf32>
    %cst = arith.constant dense<0.000000e+00> : vector<8x256xf32>
    %3 = tpu.matmul %2, %1, %cst {dimension_numbers = #tpu.dot_dimension_numbers<[1], [0], [0], [1], [0, 0, 1, 1], [], []>} : vector<8x4xf32>, vector<4x256xf32>, vector<8x256xf32> -> vector<8x256xf32>
    %c0_4 = arith.constant 0 : index
    %c0_5 = arith.constant 0 : index
    %4 = vector.load %arg5[%c0_4, %c0_5] : memref<8x1xf32, #tpu.memory_space<vmem>>, vector<8x1xf32>
    %5 = vector.broadcast %4 : vector<8x1xf32> to vector<8x256xf32>
    %6 = arith.addf %3, %5 : vector<8x256xf32>
    %c0_i32 = arith.constant 0 : i32
    %7 = arith.cmpi eq, %arg1, %c0_i32 : i32
    %c0_i32_6 = arith.constant 0 : i32
    %8 = arith.cmpi eq, %arg2, %c0_i32_6 : i32
    %9 = arith.andi %7, %8 : i1
    %10 = arith.extui %9 : i1 to i32
    %c0_i32_7 = arith.constant 0 : i32
    %11 = arith.cmpi ne, %10, %c0_i32_7 : i32
    scf.if %11 {
      %cst_11 = arith.constant 0.000000e+00 : f32
      %18 = vector.broadcast %cst_11 : f32 to vector<8x1xf32>
      %c0_12 = arith.constant 0 : index
      %c0_13 = arith.constant 0 : index
      %19 = vector.load %arg9[%c0_12, %c0_13] : memref<8x1xf32, #tpu.memory_space<vmem>>, vector<8x1xf32>
      tpu.vector_store %arg9[%c0_12, %c0_13], %18 {strides = array<i32>} : memref<8x1xf32, #tpu.memory_space<vmem>>, vector<8x1xf32>,
      %cst_14 = arith.constant 0.000000e+00 : f32
      %20 = vector.broadcast %cst_14 : f32 to vector<8x1xf32>
      %c0_15 = arith.constant 0 : index
      %c0_16 = arith.constant 0 : index
      %21 = vector.load %arg10[%c0_15, %c0_16] : memref<8x1xf32, #tpu.memory_space<vmem>>, vector<8x1xf32>
      tpu.vector_store %arg10[%c0_15, %c0_16], %20 {strides = array<i32>} : memref<8x1xf32, #tpu.memory_space<vmem>>, vector<8x1xf32>,
    } else {
    }
    %c0_i32_8 = arith.constant 0 : i32
    %12 = arith.cmpi eq, %arg1, %c0_i32_8 : i32
    %13 = arith.extui %12 : i1 to i32
    %c0_i32_9 = arith.constant 0 : i32
    %14 = arith.cmpi ne, %13, %c0_i32_9 : i32
    scf.if %14 {
      %c0_11 = arith.constant 0 : index
      %c0_12 = arith.constant 0 : index
      %18 = vector.load %arg9[%c0_11, %c0_12] : memref<8x1xf32, #tpu.memory_space<vmem>>, vector<8x1xf32>
      %cst_13 = arith.constant dense<0.000000e+00> : vector<8xf32>
      %19 = vector.multi_reduction <add>, %6, %cst_13 [1] : vector<8x256xf32> to vector<8xf32>
      %20 = vector.shape_cast %19 : vector<8xf32> to vector<8x1xf32>
      %21 = arith.addf %18, %20 : vector<8x1xf32>
      %c0_14 = arith.constant 0 : index
      %c0_15 = arith.constant 0 : index
      %22 = vector.load %arg9[%c0_14, %c0_15] : memref<8x1xf32, #tpu.memory_space<vmem>>, vector<8x1xf32>
      tpu.vector_store %arg9[%c0_14, %c0_15], %21 {strides = array<i32>} : memref<8x1xf32, #tpu.memory_space<vmem>>, vector<8x1xf32>,
      %c0_16 = arith.constant 0 : index
      %c0_17 = arith.constant 0 : index
      %23 = vector.load %arg10[%c0_16, %c0_17] : memref<8x1xf32, #tpu.memory_space<vmem>>, vector<8x1xf32>
      %24 = arith.mulf %6, %6 : vector<8x256xf32>
      %cst_18 = arith.constant dense<0.000000e+00> : vector<8xf32>
      %25 = vector.multi_reduction <add>, %24, %cst_18 [1] : vector<8x256xf32> to vector<8xf32>
      %26 = vector.shape_cast %25 : vector<8xf32> to vector<8x1xf32>
      %27 = arith.addf %23, %26 : vector<8x1xf32>
      %c0_19 = arith.constant 0 : index
      %c0_20 = arith.constant 0 : index
      %28 = vector.load %arg10[%c0_19, %c0_20] : memref<8x1xf32, #tpu.memory_space<vmem>>, vector<8x1xf32>
      tpu.vector_store %arg10[%c0_19, %c0_20], %27 {strides = array<i32>} : memref<8x1xf32, #tpu.memory_space<vmem>>, vector<8x1xf32>,
    } else {
    }
    %c1_i32 = arith.constant 1 : i32
    %15 = arith.cmpi eq, %arg1, %c1_i32 : i32
    %16 = arith.extui %15 : i1 to i32
    %c0_i32_10 = arith.constant 0 : i32
    %17 = arith.cmpi ne, %16, %c0_i32_10 : i32
    scf.if %17 {
      %c0_11 = arith.constant 0 : index
      %c0_12 = arith.constant 0 : index
      %18 = vector.load %arg9[%c0_11, %c0_12] : memref<8x1xf32, #tpu.memory_space<vmem>>, vector<8x1xf32>
      %19 = vector.shape_cast %18 : vector<8x1xf32> to vector<1x8x1xf32>
      %cst_13 = arith.constant dense<0.000000e+00> : vector<1xf32>
      %20 = vector.multi_reduction <add>, %19, %cst_13 [1, 2] : vector<1x8x1xf32> to vector<1xf32>
      %21 = vector.shape_cast %20 : vector<1xf32> to vector<1x1x1xf32>
      %22 = vector.extract %21[0, 0, 0] : f32 from vector<1x1x1xf32>
      %c0_14 = arith.constant 0 : index
      %c0_15 = arith.constant 0 : index
      %23 = vector.load %arg10[%c0_14, %c0_15] : memref<8x1xf32, #tpu.memory_space<vmem>>, vector<8x1xf32>
      %24 = vector.shape_cast %23 : vector<8x1xf32> to vector<1x8x1xf32>
      %cst_16 = arith.constant dense<0.000000e+00> : vector<1xf32>
      %25 = vector.multi_reduction <add>, %24, %cst_16 [1, 2] : vector<1x8x1xf32> to vector<1xf32>
      %26 = vector.shape_cast %25 : vector<1xf32> to vector<1x1x1xf32>
      %27 = vector.extract %26[0, 0, 0] : f32 from vector<1x1x1xf32>
      %cst_17 = arith.constant 4.8828125E-4 : f32
      %28 = arith.mulf %22, %cst_17 : f32
      %cst_18 = arith.constant 4.8828125E-4 : f32
      %29 = arith.mulf %27, %cst_18 : f32
      %30 = arith.mulf %28, %28 : f32
      %31 = arith.subf %29, %30 : f32
      %cst_19 = arith.constant 1.000000e-03 : f32
      %32 = arith.addf %31, %cst_19 : f32
      %33 = math.rsqrt %32 : f32
      %c0_20 = arith.constant 0 : index
      %c0_21 = arith.constant 0 : index
      %34 = vector.load %arg6[%c0_20, %c0_21] : memref<8x1xf32, #tpu.memory_space<vmem>>, vector<8x1xf32>
      %35 = vector.broadcast %33 : f32 to vector<8x1xf32>
      %36 = arith.mulf %34, %35 : vector<8x1xf32>
      %c0_22 = arith.constant 0 : index
      %c0_23 = arith.constant 0 : index
      %37 = vector.load %arg7[%c0_22, %c0_23] : memref<8x1xf32, #tpu.memory_space<vmem>>, vector<8x1xf32>
      %38 = vector.broadcast %28 : f32 to vector<8x1xf32>
      %39 = arith.mulf %38, %36 : vector<8x1xf32>
      %40 = arith.subf %37, %39 : vector<8x1xf32>
      %41 = vector.broadcast %36 : vector<8x1xf32> to vector<8x256xf32>
      %42 = arith.mulf %6, %41 : vector<8x256xf32>
      %43 = vector.broadcast %40 : vector<8x1xf32> to vector<8x256xf32>
      %44 = arith.addf %42, %43 : vector<8x256xf32>
      %cst_24 = arith.constant 0.000000e+00 : f32
      %45 = vector.broadcast %cst_24 : f32 to vector<8x256xf32>
      %46 = arith.cmpf oge, %44, %45 : vector<8x256xf32>
      %cst_25 = arith.constant 0.00999999977 : f32
      %47 = vector.broadcast %cst_25 : f32 to vector<8x256xf32>
      %48 = arith.mulf %47, %44 : vector<8x256xf32>
      %49 = arith.select %46, %44, %48 : vector<8x256xi1>, vector<8x256xf32>
      %c0_26 = arith.constant 0 : index
      %c0_27 = arith.constant 0 : index
      %c0_28 = arith.constant 0 : index
      %50 = vector.load %arg8[%c0_26, %c0_27, %c0_28] : memref<1x8x256xf32, #tpu.memory_space<vmem>>, vector<1x8x256xf32>
      %51 = vector.shape_cast %50 : vector<1x8x256xf32> to vector<8x256xf32>
      %52 = vector.shape_cast %49 : vector<8x256xf32> to vector<1x8x256xf32>
      tpu.vector_store %arg8[%c0_26, %c0_27, %c0_28], %52 {strides = array<i32>} : memref<1x8x256xf32, #tpu.memory_space<vmem>>, vector<1x8x256xf32>,
    } else {
    }
    return
  }
  func.func @transform_0(%arg0: i32, %arg1: i32, %arg2: i32) -> (i32, i32, i32) {
    %c0_i32 = arith.constant 0 : i32
    %c0_i32_0 = arith.constant 0 : i32
    return %arg0, %c0_i32, %arg2 : i32, i32, i32
  }
  func.func @transform_1(%arg0: i32, %arg1: i32, %arg2: i32) -> (i32, i32) {
    %c0_i32 = arith.constant 0 : i32
    %c0_i32_0 = arith.constant 0 : i32
    %c0_i32_1 = arith.constant 0 : i32
    return %c0_i32, %c0_i32_0 : i32, i32
  }
  func.func @transform_2(%arg0: i32, %arg1: i32, %arg2: i32) -> (i32, i32) {
    %c0_i32 = arith.constant 0 : i32
    %c0_i32_0 = arith.constant 0 : i32
    %c0_i32_1 = arith.constant 0 : i32
    return %c0_i32, %c0_i32_0 : i32, i32
  }
  func.func @transform_3(%arg0: i32, %arg1: i32, %arg2: i32) -> (i32, i32) {
    %c0_i32 = arith.constant 0 : i32
    %c0_i32_0 = arith.constant 0 : i32
    %c0_i32_1 = arith.constant 0 : i32
    return %c0_i32, %c0_i32_0 : i32, i32
  }
  func.func @transform_4(%arg0: i32, %arg1: i32, %arg2: i32) -> (i32, i32) {
    %c0_i32 = arith.constant 0 : i32
    %c0_i32_0 = arith.constant 0 : i32
    %c0_i32_1 = arith.constant 0 : i32
    return %c0_i32, %c0_i32_0 : i32, i32
  }
  func.func @transform_5(%arg0: i32, %arg1: i32, %arg2: i32) -> (i32, i32, i32) {
    %0 = arith.muli %arg1, %arg2 : i32
    %c0_i32 = arith.constant 0 : i32
    %c0_i32_0 = arith.constant 0 : i32
    return %arg0, %c0_i32, %0 : i32, i32, i32
  }
}

</mosaic_0001>

<llo_original>
// kernel: tpu_custom_call.1
$region0: #{tpu_custom_call.1}
  #allocation0 [shape = 'u32[]', space=smem, size = 0x4, offset = 0x4, fixed_abs, tag = 'smem constant byte address 0x4 - core index']
  #allocation1 [shape = 'u32[144,128]{1,0:T(1,128)}', space=vmem, size = 0x12000, scoped, tag = 'internal scratch']
  #allocation2 [shape = 'f32[8,1]{1,0:T(8,128)}', space=vmem, size = 0x1000, scoped, tag = 'scratch operand']
  #allocation3 [shape = 'f32[8,1]{1,0:T(8,128)}', space=vmem, size = 0x1000, scoped, tag = 'scratch operand']
  %s0 = inlined_call_operand.vmem [shape: f32[2,4,256], index: 0, kind: input, shape index: {}]
  %s1 = inlined_call_operand.vmem [shape: f32[8,4], index: 1, kind: input, shape index: {}]
  %s2 = inlined_call_operand.vmem [shape: f32[8,1], index: 2, kind: input, shape index: {}]
  %s3 = inlined_call_operand.vmem [shape: f32[8,1], index: 3, kind: input, shape index: {}]
  %s4 = inlined_call_operand.vmem [shape: f32[8,1], index: 4, kind: input, shape index: {}]
  %s5 = inlined_call_operand.hbm [shape: f32[2,8,256], index: 5, kind: output, shape index: {}]
  %s6 = sld [smem:[#allocation0]]
  $region65: #{tpu_custom_call.1} parent=0
    _
  %s8 = ssub.s32 1, %s6
  %s9 = scalar_select 0, %s8, %s6
  $region1: #{tpu_custom_call.1} parent=0
    #allocation4 [shape = 'u8[16384]{0}', space=vmem, size = 0x4000, scoped, tag = 'output window, operand 0']
    #allocation5 [shape = 's32[2]{0}', space=sflag, size = 0x8, scoped, tag = 'scoped memory for tpu_custom_call.1']
    %10 = vsyncpa [#allocation5], 0
    %s11 = scalar_lea.sflag [#allocation5], 1
    %12 = vsyncpa %s11, 0
    loop: start=0, step=1, limit=6
    $region2: #{tpu_custom_call.1} parent=1 // loop_pre_header
      _
    $region3: #{tpu_custom_call.1} parent=1 // loop_header
      %s14 = sphi 0, %s18
      %p15 = scmp.ge.s32.totalorder %s14, 6
      %s21 = sphi 0, %s40
      %s22 = sphi 0, %s36
      %s23 = sphi 0, %s32
      %s24 = sphi 0, %s21
      %s25 = sphi 0, %s22
      %s26 = sphi 0, %s23
      %s27 = sphi 0, %s24
      %s28 = sphi 0, %s25
      %s29 = sphi 0, %s26
      %s45 = sphi 0, %s47
      %s48 = sphi 0, %s45
      %s49 = sphi 0, %s48
      %s65 = sphi 0, %s49
      %s69 = sphi 0, %s69
      %s71 = sphi 0, %s69
      %s72 = sphi 0, %s71
      %s86 = sphi 0, %s72
      %s90 = sphi 0, %s90
      %s92 = sphi 0, %s90
      %s93 = sphi 0, %s92
      %s107 = sphi 0, %s93
      %s111 = sphi 0, %s111
      %s113 = sphi 0, %s111
      %s114 = sphi 0, %s113
      %s128 = sphi 0, %s114
      %s132 = sphi 0, %s132
      %s134 = sphi 0, %s132
      %s135 = sphi 0, %s134
      %s149 = sphi 0, %s135
      %s159 = sphi 0, %s161
      %s162 = sphi 0, %s159
      %s163 = sphi 0, %s162
      %s179 = sphi 0, %s163
    $region4: #{tpu_custom_call.1} parent=1 // loop_header_branch
      %17 = sbr.rel (%p15) target = $region8
    $region5: #{tpu_custom_call.1} parent=1 // loop_body
      %s19 = ssub.s32 %s14, 1
      %s20 = ssub.s32 %s14, 2
      %s30 = sadd.s32 1, %s23
      %p31 = scmp.ge.s32.totalorder %s30, 1
      %s32 = scalar_select %p31, 0, %s30
      %s33 = sadd.s32 1, %s22
      %s34 = scalar_select %p31, %s33, %s22
      %p35 = scmp.ge.s32.totalorder %s34, 2
      %s36 = scalar_select %p35, 0, %s34
      %s37 = sadd.s32 1, %s21
      %s38 = scalar_select %p35, %s37, %s21
      %p39 = scmp.ge.s32.totalorder %s38, 2
      %s40 = scalar_select %p39, 0, %s38
      %s41 = ssub.s32 %s21, %s40
      %s42 = ssub.s32 %s23, %s32
      %s43 = sor.u32 %s41, %s42
      %p44 = scmp.eq.s32.totalorder %s43, 0
      %s46 = sadd.s32 %s45, 1
      %s47 = scalar_select %p44, %s45, %s46
      %p50 = pneg %p44
      %p51 = scmp.eq.s32.totalorder %s14, 3
      %p52 = por %p50, %p51
      %p53 = scmp.ne.s32.totalorder %s45, %s48
      %p54 = scmp.eq.s32.totalorder %s14, 0
      %p55 = por %p53, %p54
      %p56 = scmp.ne.s32.totalorder %s45, %s48
      %p57 = scmp.eq.s32.totalorder %s19, 3
      %p58 = por %p56, %p57
      %p59 = scmp.ne.s32.totalorder %s48, %s49
      %p60 = scmp.eq.s32.totalorder %s19, 0
      %p61 = por %p59, %p60
      %p62 = scmp.ne.s32.totalorder %s48, %s49
      %p63 = scmp.eq.s32.totalorder %s20, 3
      %p64 = por %p62, %p63
      %p66 = scmp.ne.s32.totalorder %s49, %s65
      %p67 = scmp.eq.s32.totalorder %s20, 0
      %p68 = por %p66, %p67
      %s70 = sadd.s32 %s69, 1
      %p73 = scmp.eq.s32.totalorder %s14, 3
      %p74 = scmp.ne.s32.totalorder %s69, %s71
      %p75 = scmp.eq.s32.totalorder %s14, 0
      %p76 = por %p74, %p75
      %p77 = scmp.ne.s32.totalorder %s69, %s71
      %p78 = scmp.eq.s32.totalorder %s19, 3
      %p79 = por %p77, %p78
      %p80 = scmp.ne.s32.totalorder %s71, %s72
      %p81 = scmp.eq.s32.totalorder %s19, 0
      %p82 = por %p80, %p81
      %p83 = scmp.ne.s32.totalorder %s71, %s72
      %p84 = scmp.eq.s32.totalorder %s20, 3
      %p85 = por %p83, %p84
      %p87 = scmp.ne.s32.totalorder %s72, %s86
      %p88 = scmp.eq.s32.totalorder %s20, 0
      %p89 = por %p87, %p88
      %s91 = sadd.s32 %s90, 1
      %p94 = scmp.eq.s32.totalorder %s14, 3
      %p95 = scmp.ne.s32.totalorder %s90, %s92
      %p96 = scmp.eq.s32.totalorder %s14, 0
      %p97 = por %p95, %p96
      %p98 = scmp.ne.s32.totalorder %s90, %s92
      %p99 = scmp.eq.s32.totalorder %s19, 3
      %p100 = por %p98, %p99
      %p101 = scmp.ne.s32.totalorder %s92, %s93
      %p102 = scmp.eq.s32.totalorder %s19, 0
      %p103 = por %p101, %p102
      %p104 = scmp.ne.s32.totalorder %s92, %s93
      %p105 = scmp.eq.s32.totalorder %s20, 3
      %p106 = por %p104, %p105
      %p108 = scmp.ne.s32.totalorder %s93, %s107
      %p109 = scmp.eq.s32.totalorder %s20, 0
      %p110 = por %p108, %p109
      %s112 = sadd.s32 %s111, 1
      %p115 = scmp.eq.s32.totalorder %s14, 3
      %p116 = scmp.ne.s32.totalorder %s111, %s113
      %p117 = scmp.eq.s32.totalorder %s14, 0
      %p118 = por %p116, %p117
      %p119 = scmp.ne.s32.totalorder %s111, %s113
      %p120 = scmp.eq.s32.totalorder %s19, 3
      %p121 = por %p119, %p120
      %p122 = scmp.ne.s32.totalorder %s113, %s114
      %p123 = scmp.eq.s32.totalorder %s19, 0
      %p124 = por %p122, %p123
      %p125 = scmp.ne.s32.totalorder %s113, %s114
      %p126 = scmp.eq.s32.totalorder %s20, 3
      %p127 = por %p125, %p126
      %p129 = scmp.ne.s32.totalorder %s114, %s128
      %p130 = scmp.eq.s32.totalorder %s20, 0
      %p131 = por %p129, %p130
      %s133 = sadd.s32 %s132, 1
      %p136 = scmp.eq.s32.totalorder %s14, 3
      %p137 = scmp.ne.s32.totalorder %s132, %s134
      %p138 = scmp.eq.s32.totalorder %s14, 0
      %p139 = por %p137, %p138
      %p140 = scmp.ne.s32.totalorder %s132, %s134
      %p141 = scmp.eq.s32.totalorder %s19, 3
      %p142 = por %p140, %p141
      %p143 = scmp.ne.s32.totalorder %s134, %s135
      %p144 = scmp.eq.s32.totalorder %s19, 0
      %p145 = por %p143, %p144
      %p146 = scmp.ne.s32.totalorder %s134, %s135
      %p147 = scmp.eq.s32.totalorder %s20, 3
      %p148 = por %p146, %p147
      %p150 = scmp.ne.s32.totalorder %s135, %s149
      %p151 = scmp.eq.s32.totalorder %s20, 0
      %p152 = por %p150, %p151
      %s153 = smul.u32 %s22, %s23
      %s154 = smul.u32 %s36, %s32
      %s155 = ssub.s32 %s21, %s40
      %s156 = ssub.s32 %s153, %s154
      %s157 = sor.u32 %s155, %s156
      %p158 = scmp.eq.s32.totalorder %s157, 0
      %s160 = sadd.s32 %s159, 1
      %s161 = scalar_select %p158, %s159, %s160
      %p164 = pneg %p158
      %p165 = scmp.eq.s32.totalorder %s14, 3
      %p166 = por %p164, %p165
      %p167 = scmp.ne.s32.totalorder %s159, %s162
      %p168 = scmp.eq.s32.totalorder %s14, 0
      %p169 = por %p167, %p168
      %p170 = scmp.ne.s32.totalorder %s159, %s162
      %p171 = scmp.eq.s32.totalorder %s19, 3
      %p172 = por %p170, %p171
      %p173 = scmp.ne.s32.totalorder %s162, %s163
      %p174 = scmp.eq.s32.totalorder %s19, 0
      %p175 = por %p173, %p174
      %p176 = scmp.ne.s32.totalorder %s162, %s163
      %p177 = scmp.eq.s32.totalorder %s20, 3
      %p178 = por %p176, %p177
      %p180 = scmp.ne.s32.totalorder %s163, %s179
      %p181 = scmp.eq.s32.totalorder %s20, 0
      %p182 = por %p180, %p181
      %p183 = scmp.le.s32.totalorder 1, %s14
      %p184 = scmp.lt.s32.totalorder %s14, 5
      %p185 = pnand %p183, %p184
      %p186 = pneg %p185
      // Predicated region
      $region9: #{tpu_custom_call.1} parent=5 // pred_check
        _
      $region10: #{tpu_custom_call.1} parent=5 // pred_check_branch
        %188 = sbr.rel (%p185) target = $region12
      $region11: #{tpu_custom_call.1} parent=5 // pred_region
        %s189 = ssub.s32 %s14, 1
        // Predicated region
        $region13: #{tpu_custom_call.1} parent=11 // pred_check
          %p190 = pneg %p82
        $region14: #{tpu_custom_call.1} parent=11 // pred_check_branch
          %192 = sbr.rel (%p190) target = $region16
        $region15: #{tpu_custom_call.1} parent=11 // pred_region
          _
        $region16: #{tpu_custom_call.1} parent=11 // pred_fallthru
          _
        // Predicated region
        $region17: #{tpu_custom_call.1} parent=11 // pred_check
          %p193 = pneg %p103
        $region18: #{tpu_custom_call.1} parent=11 // pred_check_branch
          %195 = sbr.rel (%p193) target = $region20
        $region19: #{tpu_custom_call.1} parent=11 // pred_region
          _
        $region20: #{tpu_custom_call.1} parent=11 // pred_fallthru
          _
        // Predicated region
        $region21: #{tpu_custom_call.1} parent=11 // pred_check
          %p196 = pneg %p124
        $region22: #{tpu_custom_call.1} parent=11 // pred_check_branch
          %198 = sbr.rel (%p196) target = $region24
        $region23: #{tpu_custom_call.1} parent=11 // pred_region
          _
        $region24: #{tpu_custom_call.1} parent=11 // pred_fallthru
          _
        // Predicated region
        $region25: #{tpu_custom_call.1} parent=11 // pred_check
          %p199 = pneg %p145
        $region26: #{tpu_custom_call.1} parent=11 // pred_check_branch
          %201 = sbr.rel (%p199) target = $region28
        $region27: #{tpu_custom_call.1} parent=11 // pred_region
          _
        $region28: #{tpu_custom_call.1} parent=11 // pred_fallthru
          _
      $region12: #{tpu_custom_call.1} parent=5 // pred_fallthru
        _
      %p202 = scmp.lt.s32.totalorder %s14, 4
      // Predicated region
      $region29: #{tpu_custom_call.1} parent=5 // pred_check
        %p203 = pneg %p202
      $region30: #{tpu_custom_call.1} parent=5 // pred_check_branch
        %205 = sbr.rel (%p203) target = $region32
      $region31: #{tpu_custom_call.1} parent=5 // pred_region
        // Predicated region
        $region33: #{tpu_custom_call.1} parent=31 // pred_check
          %p206 = pneg %p55
        $region34: #{tpu_custom_call.1} parent=31 // pred_check_branch
          %208 = sbr.rel (%p206) target = $region36
        $region35: #{tpu_custom_call.1} parent=31 // pred_region
          %s209 = smul.u32 2, %s23
          %p210 = scmp.lt.s32.totalorder %s21, 1
          %s211 = scalar_select %p210, %s21, 1
          %p212 = scmp.lt.s32.totalorder %s209, 1
          %s213 = scalar_select %p212, %s209, 1
          %s214 = smul.addr %s211, 2
          %s215 = sadd.s32 %s213, %s214
          %s216 = smul.addr %s215, 4
          %s217 = scalar_lea.vmem %s0, %s216
          %s218 = smul.u32 2, %s23
        $region36: #{tpu_custom_call.1} parent=31 // pred_fallthru
          _
      $region32: #{tpu_custom_call.1} parent=5 // pred_fallthru
        _
      %p219 = scmp.le.s32.totalorder 1, %s14
      %p220 = scmp.lt.s32.totalorder %s14, 5
      %p221 = pnand %p219, %p220
      %p222 = pneg %p221
      // Predicated region
      $region37: #{tpu_custom_call.1} parent=5 // pred_check
        _
      $region38: #{tpu_custom_call.1} parent=5 // pred_check_branch
        %224 = sbr.rel (%p221) target = $region40
      $region39: #{tpu_custom_call.1} parent=5 // pred_region
        %s225 = ssub.s32 %s14, 1
        %s226 = smul.u32 2, %s26
        %p227 = scmp.lt.s32.totalorder %s24, 1
        %s228 = scalar_select %p227, %s24, 1
        %p229 = scmp.lt.s32.totalorder %s226, 1
        %s230 = scalar_select %p229, %s226, 1
        %s231 = smul.addr %s228, 2
        %s232 = sadd.s32 %s230, %s231
        %s233 = smul.addr %s232, 4
        %s234 = scalar_lea.vmem %s0, %s233
        %p235 = pneg %p61
        %p236 = pneg %p58
        %p237 = pneg %p82
        %p238 = pneg %p79
        %p239 = pneg %p103
        %p240 = pneg %p100
        %p241 = pneg %p124
        %p242 = pneg %p121
        %p243 = pneg %p145
        %p244 = pneg %p142
        %p245 = pneg %p175
        %p246 = pneg %p172
        %s247 = sand.u32 %s162, 1
        %s248 = scalar_lea.sflag [#allocation5], %s247
        %s249 = sand.u32 %s162, 1
        %s250 = smul.addr %s249, 16
        %s251 = scalar_lea.vmem [#allocation4], %s250
        %s252 = smul.u32 2, %s26
        %p253 = scmp.lt.s32.totalorder %s24, 1
        %s254 = scalar_select %p253, %s24, 1
        %p255 = scmp.lt.s32.totalorder %s252, 1
        %s256 = scalar_select %p255, %s252, 1
        %s257 = smul.addr %s254, 2
        %s258 = sadd.s32 %s256, %s257
        %s259 = smul.addr %s258, 4
        %s260 = scalar_lea.vmem %s0, %s259
        %s261 = smul.u32 2, %s26
        %s262 = smul.u32 %s25, %s26
        %s263 = smul.u32 2, %s262
        %v264 = vld [vmem:[%s260] sm:$0xff]
        %v265 = vld [vmem:[%s1] sm:$0xff]
        %v266 = vld [vmem:[%s2] sm:$0xff]
        %268 = vset.pattern.permute.xlu0 0
        %269 = vperm.xlu0 %268, %v266
        %v270 = vpop.permute.xlu0 %269
        %v273 = vcombine.high %v264, %v264
        %vm274 = vcmask 31744
        %v276 = vsel %vm274, %v265, 0
        %vm278 = vcmask 1043456
        %v279 = vsel %vm278, %v264, 0
        %v281 = vsel %vm278, %v273, 0
        %283 = vmatprep.subr.mxu0 %v281
        %284 = vmatpush1.msra.mxu0 %v279
        %285 = vmatprep.subr.mxu0 0.0
        %286 = vmatpush1.msra.mxu0 0.0
        %287 = vmatprep.subr.mxu0 0.0
        %288 = vmatpush1.msra.mxu0 0.0
        %289 = vmatprep.subr.mxu0 0.0
        %290 = vmatpush1.msra.mxu0 0.0
        %291 = vmatprep.subr.mxu0 0.0
        %292 = vmatpush1.msra.mxu0 0.0
        %293 = vmatprep.subr.mxu0 0.0
        %294 = vmatpush1.msra.mxu0 0.0
        %295 = vmatprep.subr.mxu0 0.0
        %296 = vmatpush1.msra.mxu0 0.0
        %297 = vmatprep.subr.mxu0 0.0
        %298 = vmatpush1.msra.mxu0 0.0
        %299 = vmatprep.subr.mxu0 0.0
        %300 = vmatpush1.msra.mxu0 0.0
        %301 = vmatprep.subr.mxu0 0.0
        %302 = vmatpush1.msra.mxu0 0.0
        %303 = vmatprep.subr.mxu0 0.0
        %304 = vmatpush1.msra.mxu0 0.0
        %305 = vmatprep.subr.mxu0 0.0
        %306 = vmatpush1.msra.mxu0 0.0
        %307 = vmatprep.subr.mxu0 0.0
        %308 = vmatpush1.msra.mxu0 0.0
        %309 = vmatprep.subr.mxu0 0.0
        %310 = vmatpush1.msra.mxu0 0.0
        %311 = vmatprep.subr.mxu0 0.0
        %312 = vmatpush1.msra.mxu0 0.0
        %313 = vmatprep.subr.mxu0 0.0
        %314 = vmatpush1.msra.mxu0 0.0
        %315 = vmatprep.subr.mxu0 0.0
        %316 = vmatpush1.msra.mxu0 0.0
        %317 = vmatprep.subr.mxu0 0.0
        %318 = vmatpush1.msra.mxu0 0.0
        %319 = vmatprep.subr.mxu0 0.0
        %320 = vmatpush1.msra.mxu0 0.0
        %321 = vmatprep.subr.mxu0 0.0
        %322 = vmatpush1.msra.mxu0 0.0
        %323 = vmatprep.subr.mxu0 0.0
        %324 = vmatpush1.msra.mxu0 0.0
        %325 = vmatprep.subr.mxu0 0.0
        %326 = vmatpush1.msra.mxu0 0.0
        %327 = vmatprep.subr.mxu0 0.0
        %328 = vmatpush1.msra.mxu0 0.0
        %329 = vmatprep.subr.mxu0 0.0
        %330 = vmatpush1.msra.mxu0 0.0
        %331 = vmatprep.subr.mxu0 0.0
        %332 = vmatpush1.msra.mxu0 0.0
        %333 = vmatprep.subr.mxu0 0.0
        %334 = vmatpush1.msra.mxu0 0.0
        %335 = vmatprep.subr.mxu0 0.0
        %336 = vmatpush1.msra.mxu0 0.0
        %337 = vmatprep.subr.mxu0 0.0
        %338 = vmatpush1.msra.mxu0 0.0
        %339 = vmatprep.subr.mxu0 0.0
        %340 = vmatpush1.msra.mxu0 0.0
        %341 = vmatprep.subr.mxu0 0.0
        %342 = vmatpush1.msra.mxu0 0.0
        %343 = vmatprep.subr.mxu0 0.0
        %344 = vmatpush1.msra.mxu0 0.0
        %345 = vmatprep.subr.mxu0 0.0
        %346 = vmatpush1.msra.mxu0 0.0
        %347 = vmatprep.mubr.f32.mxu0 0.0
        %348 = vmatmul.mubr.f32.gmra.mrb[0].mxu0 %v276
        %v349 = vpop.f32.mrb[0].mxu0
        %v350 = vadd.f32 %v270, %v349
        %v351 = vpop.f32.mrb[0].mxu0
        %v352 = vadd.f32 %v270, %v351
        %353 = vdwg.mxu0
        %p354 = scmp.eq.s32.totalorder %s25, 0
        %p355 = scmp.eq.s32.totalorder %s26, 0
        %p356 = pnand %p354, %p355
        %p357 = pneg %p356
        // Predicated region
        $region41: #{tpu_custom_call.1} parent=39 // pred_check
          _
        $region42: #{tpu_custom_call.1} parent=39 // pred_check_branch
          %359 = sbr.rel (%p356) target = $region44
        $region43: #{tpu_custom_call.1} parent=39 // pred_region
          %vm360 = vcmask 7168
          %361 = vst.msk [vmem:[#allocation2] sm:$0xff] %vm360, 0.0
          %362 = vst.msk [vmem:[#allocation3] sm:$0xff] %vm360, 0.0
        $region44: #{tpu_custom_call.1} parent=39 // pred_fallthru
          _
        // Predicated region
        $region45: #{tpu_custom_call.1} parent=39 // pred_check
          %p363 = pneg %p354
        $region46: #{tpu_custom_call.1} parent=39 // pred_check_branch
          %365 = sbr.rel (%p363) target = $region48
        $region47: #{tpu_custom_call.1} parent=39 // pred_region
          %v366 = vld [vmem:[#allocation2] sm:$0xff]
          %v367 = vadd.f32 %v350, %v352
          %368 = vadd.xlane.f32.xlu0 %v367
          %v369 = vpop.xlane.xlu0 %368
          %v370 = vadd.f32 %v366, %v369
          %vm371 = vcmask 7168
          %372 = vst.msk [vmem:[#allocation2] sm:$0xff] %vm371, %v370
          %v373 = vld [vmem:[#allocation3] sm:$0xff]
          %v374 = vmul.f32 %v350, %v350
          %v375 = vmul.f32 %v352, %v352
          %v376 = vadd.f32 %v374, %v375
          %377 = vadd.xlane.f32.xlu0 %v376
          %v378 = vpop.xlane.xlu0 %377
          %v379 = vadd.f32 %v373, %v378
          %380 = vst.msk [vmem:[#allocation3] sm:$0xff] %vm371, %v379
        $region48: #{tpu_custom_call.1} parent=39 // pred_fallthru
          _
        %p381 = scmp.eq.s32.totalorder %s25, 1
        // Predicated region
        $region49: #{tpu_custom_call.1} parent=39 // pred_check
          %p382 = pneg %p381
        $region50: #{tpu_custom_call.1} parent=39 // pred_check_branch
          %384 = sbr.rel (%p382) target = $region52
        $region51: #{tpu_custom_call.1} parent=39 // pred_region
          %v385 = vld [vmem:[#allocation2] sm:$0xff]
          %vm386 = vcmask 7168
          %v387 = vsel %vm386, %v385, 0.0
          %388 = vadd.xlane.f32.xlu0 %v387
          %v389 = vpop.xlane.xlu0 %388
          %v390 = vrot.slane %v389, 4
          %v391 = vadd.f32 %v389, %v390
          %v392 = vrot.slane %v391, 2
          %v393 = vadd.f32 %v391, %v392
          %v394 = vrot.slane %v393, 1
          %v395 = vadd.f32 %v393, %v394
          %s396 = vtos %v395
          %v397 = vld [vmem:[#allocation3] sm:$0xff]
          %v398 = vsel %vm386, %v397, 0.0
          %399 = vadd.xlane.f32.xlu0 %v398
          %v400 = vpop.xlane.xlu0 %399
          %v401 = vrot.slane %v400, 4
          %v402 = vadd.f32 %v400, %v401
          %v403 = vrot.slane %v402, 2
          %v404 = vadd.f32 %v402, %v403
          %v405 = vrot.slane %v404, 1
          %v406 = vadd.f32 %v404, %v405
          %s407 = vtos %v406
          %s408 = smul.f32 %s396, 0.00048828125
          %s409 = smul.f32 %s407, 0.00048828125
          %s410 = smul.f32 %s408, %s408
          %s411 = ssub.f32 %s409, %s410
          %s412 = sadd.f32 %s411, 0.001
          %v413 = vstv %s412
          %v414 = vrsqrt.pop %v413
          %s415 = vtos %v414
          %v416 = vld [vmem:[%s3] sm:$0xff]
          %v417 = vstv %s415
          %v418 = vmul.f32 %v416, %v417
          %v419 = vld [vmem:[%s4] sm:$0xff]
          %v420 = vstv %s408
          %v421 = vmul.f32 %v420, %v418
          %v422 = vsub.f32 %v419, %v421
          %424 = vset.pattern.permute.xlu0 0
          %425 = vperm.xlu0 %424, %v418
          %v426 = vpop.permute.xlu0 %425
          %v428 = vmul.f32 %v350, %v426
          %v429 = vmul.f32 %v352, %v426
          %431 = vset.pattern.permute.xlu0 0
          %432 = vperm.xlu0 %431, %v422
          %v433 = vpop.permute.xlu0 %432
          %v435 = vadd.f32 %v428, %v433
          %v436 = vadd.f32 %v429, %v433
          %vm437 = vcmp.ge.f32.partialorder %v435, 0.0
          %vm438 = vcmp.ge.f32.partialorder %v436, 0.0
          %v439 = vmul.f32 %v435, 0.01
          %v440 = vmul.f32 %v436, 0.01
          %v441 = vsel %vm437, %v435, %v439
          %v442 = vsel %vm438, %v436, %v440
          %443 = vst [vmem:[%s251] sm:$0xff] %v441
          %444 = vst [vmem:[%s251 + $0x8] sm:$0xff] %v442
        $region52: #{tpu_custom_call.1} parent=39 // pred_fallthru
          _
        %s445 = sand.u32 %s162, 1
        %s446 = scalar_lea.sflag [#allocation5], %s445
        %s447 = sand.u32 %s162, 1
        %s448 = smul.addr %s447, 16
        %s449 = scalar_lea.vmem [#allocation4], %s448
        // Predicated region
        $region53: #{tpu_custom_call.1} parent=39 // pred_check
          %p450 = pneg %p172
        $region54: #{tpu_custom_call.1} parent=39 // pred_check_branch
          %452 = sbr.rel (%p450) target = $region56
        $region55: #{tpu_custom_call.1} parent=39 // pred_region
          %s453 = smul.u32 %s25, %s26
          %s454 = smul.u32 2, %s453
          %s456 = ssub.s32 256, 256
          %457 = vsyncadd %s446, %s456
          %s458 = smul.addr %s24, 2
          %s459 = sadd.s32 %s454, %s458
          %s460 = smul.addr %s459, 128
          %s461 = scalar_lea.hbm %s5, %s460
          %s463 = sshll.u32 %s449, 4
          %s464 = int_to_ptr.vmem [resolvable:$true] %s463
          %466 = dma.vmem_to_hbm [thread:$0]  %s464, 256, %s461, %s446
        $region56: #{tpu_custom_call.1} parent=39 // pred_fallthru
          _
      $region40: #{tpu_custom_call.1} parent=5 // pred_fallthru
        _
      %p467 = scmp.le.s32.totalorder 2, %s14
      // Predicated region
      $region57: #{tpu_custom_call.1} parent=5 // pred_check
        %p468 = pneg %p467
      $region58: #{tpu_custom_call.1} parent=5 // pred_check_branch
        %470 = sbr.rel (%p468) target = $region60
      $region59: #{tpu_custom_call.1} parent=5 // pred_region
        %s471 = ssub.s32 %s14, 2
        // Predicated region
        $region61: #{tpu_custom_call.1} parent=59 // pred_check
          %p472 = pneg %p178
        $region62: #{tpu_custom_call.1} parent=59 // pred_check_branch
          %474 = sbr.rel (%p472) target = $region64
        $region63: #{tpu_custom_call.1} parent=59 // pred_region
          %s475 = sand.u32 %s163, 1
          %s476 = scalar_lea.sflag [#allocation5], %s475
          %s477 = sand.u32 %s163, 1
          %s478 = smul.addr %s477, 16
          %s479 = scalar_lea.vmem [#allocation4], %s478
          %480 = dma.done %s476, 256
        $region64: #{tpu_custom_call.1} parent=59 // pred_fallthru
          _
      $region60: #{tpu_custom_call.1} parent=5 // pred_fallthru
        _
    $region6: #{tpu_custom_call.1} parent=1 // loop_footer
      %s18 = sadd.s32 1, %s14
    $region7: #{tpu_custom_call.1} parent=1 // loop_footer_branch
      %13 = sbr.rel target = $region3
    $region8: #{tpu_custom_call.1} parent=1 // loop_exit
      _
    %481 = vsyncpa [#allocation5], 1
    %s482 = scalar_lea.sflag [#allocation5], 1
    %483 = vsyncpa %s482, 1

</llo_original>
